<compile_context>
chip_gen: v7x
topology: tpu7x:2x2x1
jax: 0.10.0
libtpu: 0.0.40
codegen_flags: <defaults>
</compile_context>

<pallas_src>
import math
import functools

import jax
import jax.numpy as jnp
from jax.experimental import pallas as pl
from jax.experimental.pallas import tpu as pltpu


_VMEM_LIMIT = 48 * 1024 * 1024   # fits v5e/v6e (128 MiB) and v7x (64 MiB) with headroom
_ROW_TILE = 512                  # row tile for linear kernels (~85% HBM roofline)
_Q_TILE = 256                    # query tile for attention kernels


def _row_tile(n):
    return n if n <= _ROW_TILE else _ROW_TILE


def _q_tile(s):
    return s if s <= _Q_TILE else _Q_TILE


def _softmax_rows(x):
    m = jnp.max(x, axis=-1, keepdims=True)
    e = jnp.exp(x - m)
    return e * pl.reciprocal(jnp.sum(e, axis=-1, keepdims=True), approx=True)


# ------------------------- Pallas kernels -------------------------

def _linear_kernel(x_ref, w_ref, b_ref, o_ref, *, relu):
    # x: (TN, In) bf16, w: (In, Out) bf16, b: (1, Out) f32 -> o: (TN, Out) f32
    acc = jnp.dot(x_ref[...], w_ref[...], preferred_element_type=jnp.float32)
    acc = acc + b_ref[...]
    if relu:
        acc = jnp.maximum(acc, 0.0)
    o_ref[...] = acc


def pallas_linear(x, w, b, *, relu=False):
    """x: (..., In) -> (..., Out) = [relu](x @ w + b); bf16 MXU, f32 accumulate."""
    in_dim, out_dim = w.shape
    lead = x.shape[:-1]
    x2d = x.reshape(-1, in_dim)
    n = x2d.shape[0]
    tn = _row_tile(n)
    out = pl.pallas_call(
        functools.partial(_linear_kernel, relu=relu),
        out_shape=jax.ShapeDtypeStruct((n, out_dim), jnp.float32),
        grid=(pl.cdiv(n, tn),),
        in_specs=[
            pl.BlockSpec((tn, in_dim), lambda i: (i, 0)),
            pl.BlockSpec((in_dim, out_dim), lambda i: (0, 0)),
            pl.BlockSpec((1, out_dim), lambda i: (0, 0)),
        ],
        out_specs=pl.BlockSpec((tn, out_dim), lambda i: (i, 0)),
        compiler_params=pltpu.CompilerParams(
            dimension_semantics=("parallel",),
            vmem_limit_bytes=_VMEM_LIMIT),
    )(x2d.astype(jnp.bfloat16), w.astype(jnp.bfloat16),
      b.reshape(1, out_dim).astype(jnp.float32))
    return out.reshape(*lead, out_dim)


def _final_head_kernel(x_ref, w1_ref, b1_ref, w2_ref, b2_ref, o_ref):
    # fused: relu(x @ w1 + b1) @ w2 + b2
    h = jnp.dot(x_ref[...], w1_ref[...], preferred_element_type=jnp.float32)
    h = jnp.maximum(h + b1_ref[...], 0.0)
    o_ref[...] = (jnp.dot(h.astype(w2_ref.dtype), w2_ref[...],
                          preferred_element_type=jnp.float32) + b2_ref[...])


def pallas_final_head(x, w1, b1, w2, b2):
    in_dim, d = w1.shape
    lead = x.shape[:-1]
    x2d = x.reshape(-1, in_dim)
    n = x2d.shape[0]
    tn = _row_tile(n)
    out = pl.pallas_call(
        _final_head_kernel,
        out_shape=jax.ShapeDtypeStruct((n, 1), jnp.float32),
        grid=(pl.cdiv(n, tn),),
        in_specs=[
            pl.BlockSpec((tn, in_dim), lambda i: (i, 0)),
            pl.BlockSpec((in_dim, d), lambda i: (0, 0)),
            pl.BlockSpec((1, d), lambda i: (0, 0)),
            pl.BlockSpec((d, 1), lambda i: (0, 0)),
            pl.BlockSpec((1, 1), lambda i: (0, 0)),
        ],
        out_specs=pl.BlockSpec((tn, 1), lambda i: (i, 0)),
        compiler_params=pltpu.CompilerParams(
            dimension_semantics=("parallel",),
            vmem_limit_bytes=_VMEM_LIMIT),
    )(x2d.astype(jnp.bfloat16), w1.astype(jnp.bfloat16),
      b1.reshape(1, d).astype(jnp.float32),
      w2.astype(jnp.bfloat16), b2.reshape(1, 1).astype(jnp.float32))
    return out.reshape(*lead, 1)


def _base_attn_kernel(rel_ref, ts_ref, base_ref, *, l1, l2, qrelation_include, tq):
    # Precomputes the head/layer-invariant part of the attention blend:
    #   base = (1-l1)*l2*time_attn + l1*rel_attn    (if qrelation_include)
    #   base = l2*time_attn                         (otherwise)
    qi = pl.program_id(1)
    rel = rel_ref[0]          # (TQ, S) f32
    ts = ts_ref[0]            # (TQ, S) f32
    TQ, S = ts.shape
    row = qi * tq + jax.lax.broadcasted_iota(jnp.int32, (TQ, S), 0)
    col = jax.lax.broadcasted_iota(jnp.int32, (TQ, S), 1)
    fut = col > row           # future mask, same as np.triu(..., k=1)

    time_stamp = jnp.exp(-jnp.abs(ts))
    time_stamp = jnp.where(fut, -jnp.inf, time_stamp)   # diag never masked -> safe
    time_attn = _softmax_rows(time_stamp)

    if qrelation_include:
        # NOTE: mirrors the reference exactly -- rel is masked to FUTURE positions.
        rel_m = rel * fut.astype(jnp.float32)
        rel_attn = _softmax_rows(
            jnp.where(rel_m == 0.0, jnp.float32(-10000.0), rel_m))
        base = (1.0 - l1) * l2 * time_attn + l1 * rel_attn
    else:
        base = l2 * time_attn
    base_ref[0] = base


def pallas_base_attention(rel, timestamp, l1, l2, qrelation_include):
    B, S, _ = rel.shape
    tq = _q_tile(S)
    base = pl.pallas_call(
        functools.partial(_base_attn_kernel, l1=float(l1), l2=float(l2),
                          qrelation_include=bool(qrelation_include), tq=tq),
        out_shape=jax.ShapeDtypeStruct((B, S, S), jnp.float32),
        grid=(B, pl.cdiv(S, tq)),
        in_specs=[pl.BlockSpec((1, tq, S), lambda b, i: (b, i, 0)),
                  pl.BlockSpec((1, tq, S), lambda b, i: (b, i, 0))],
        out_specs=pl.BlockSpec((1, tq, S), lambda b, i: (b, i, 0)),
        compiler_params=pltpu.CompilerParams(
            dimension_semantics=("parallel", "parallel"),
            vmem_limit_bytes=_VMEM_LIMIT),
    )(rel.astype(jnp.float32), timestamp.astype(jnp.float32))
    if qrelation_include:
        coef = (1.0 - float(l1)) * (1.0 - float(l2))
    else:
        coef = 1.0 - float(l2)
    return base, coef


def _attention_kernel(q_ref, k_ref, v_ref, base_ref, out_ref, *attn_refs,
                      num_heads, coef, tq):
    # q: (1,TQ,D) bf16, k/v: (1,S,D) bf16, base: (1,TQ,S) f32
    # out: (1,TQ,D) f32, optional attn: (1,H,TQ,S) f32 (last layer only)
    qi = pl.program_id(1)
    q = q_ref[0]              # (TQ, D)
    k = k_ref[0]              # (S, D)
    v = v_ref[0]              # (S, D)
    base = base_ref[0]        # (TQ, S)
    TQ, D = q.shape
    S = k.shape[0]
    Hd = D // num_heads
    scale = jnp.float32(1.0 / math.sqrt(Hd))

    row = qi * tq + jax.lax.broadcasted_iota(jnp.int32, (TQ, S), 0)
    col = jax.lax.broadcasted_iota(jnp.int32, (TQ, S), 1)
    fut = col > row

    outs = []
    for h in range(num_heads):            # static unroll; heads stay on lanes
        lo, hi = h * Hd, (h + 1) * Hd
        qh, kh, vh = q[:, lo:hi], k[:, lo:hi], v[:, lo:hi]
        scores = jnp.dot(qh, kh.T, preferred_element_type=jnp.float32) * scale
        scores = jnp.where(fut, jnp.float32(-1e9), scores)
        prob = _softmax_rows(scores)
        attn_h = coef * prob + base        # == full blended prob_attn of reference
        outs.append(jnp.dot(attn_h.astype(v.dtype), vh,
                            preferred_element_type=jnp.float32))
        if attn_refs:
            attn_refs[0][0, h] = attn_h
    # single lane-dense store (heads concatenated on the lane axis == head concat)
    out_ref[0] = jnp.concatenate(outs, axis=-1)


def pallas_mha_attention(q, k, v, base_attn, coef, num_heads, *, emit_attn):
    """q,k,v: (B,S,D) lane-dense. Returns (B,S,D) [, attn (B,H,S,S) if emit_attn]."""
    B, S, D = q.shape
    H = num_heads
    tq = _q_tile(S)
    in_specs = [
        pl.BlockSpec((1, tq, D), lambda b, i: (b, i, 0)),
        pl.BlockSpec((1, S, D), lambda b, i: (b, 0, 0)),
        pl.BlockSpec((1, S, D), lambda b, i: (b, 0, 0)),
        pl.BlockSpec((1, tq, S), lambda b, i: (b, i, 0)),
    ]
    out_spec_o = pl.BlockSpec((1, tq, D), lambda b, i: (b, i, 0))
    kernel = functools.partial(_attention_kernel, num_heads=H,
                               coef=float(coef), tq=tq)
    if emit_attn:
        out_shape = (jax.ShapeDtypeStruct((B, S, D), jnp.float32),
                     jax.ShapeDtypeStruct((B, H, S, S), jnp.float32))
        out_specs = (out_spec_o,
                     pl.BlockSpec((1, H, tq, S), lambda b, i: (b, 0, i, 0)))
    else:
        out_shape = jax.ShapeDtypeStruct((B, S, D), jnp.float32)
        out_specs = out_spec_o
    return pl.pallas_call(
        kernel,
        out_shape=out_shape,
        grid=(B, pl.cdiv(S, tq)),
        in_specs=in_specs,
        out_specs=out_specs,
        compiler_params=pltpu.CompilerParams(
            dimension_semantics=("parallel", "parallel"),
            vmem_limit_bytes=_VMEM_LIMIT),
    )(q.astype(jnp.bfloat16), k.astype(jnp.bfloat16), v.astype(jnp.bfloat16),
      base_attn)


# ------------------------- parameter init (deterministic) -------------------------

def _init_linear(key, in_dim, out_dim):
    kw, kb = jax.random.split(key)
    bound = 1.0 / math.sqrt(in_dim)
    w = jax.random.uniform(kw, (in_dim, out_dim), jnp.float32, -bound, bound)
    b = jax.random.uniform(kb, (out_dim,), jnp.float32, -bound, bound)
    return w, b


def init_srl_kt_params(key, embed_size, num_heads, num_layers, num_items):
    D = embed_size
    keys = jax.random.split(key, 6 + num_layers)
    use_table = 0.1 * jax.random.normal(keys[0], (num_items, D), jnp.float32)
    type_table = 0.1 * jax.random.normal(keys[1], (4, D), jnp.float32)
    type_table = type_table.at[0].set(0.0)  # padding_idx=0

    w_int, b_int = _init_linear(keys[2], 4 * D, D)   # lin_in_interaction
    w_f1, b_f1 = _init_linear(keys[3], 2 * D, D)     # final_out[0]
    w_f2, b_f2 = _init_linear(keys[4], D, 1)         # final_out[3]

    attn_layers = []
    for li in range(num_layers):
        lk = jax.random.split(keys[5 + li], 3)
        wq, bq = _init_linear(lk[0], D, D)
        wk, bk = _init_linear(lk[1], D, D)
        wv, bv = _init_linear(lk[2], D, D)
        attn_layers.append(dict(wq=wq, bq=bq, wk=wk, bk=bk, wv=wv, bv=bv))

    return dict(
        embed_size=D,
        use_table=use_table,
        item_type_embeds=type_table,
        w_int=w_int, b_int=b_int,
        w_f1=w_f1, b_f1=b_f1,
        w_f2=w_f2, b_f2=b_f2,
        attn_layers=attn_layers,
        l1=0.37,   # nn.Parameter(torch.rand(1)) -> fixed deterministic scalar
        l2=0.62,
    )


# ------------------------- forward pass -------------------------

def srl_kt_forward(params, item_inputs, label_inputs, type_inputs, item_ids,
                   rel, timestamp, item_types, qresp_inputs,
                   *, num_heads, ablation):
    D = params['embed_size']
    B, S = item_inputs.shape
    use_table = params['use_table']
    type_table = params['item_type_embeds']

    # item_type_embeds(item_types) is computed but unused in the torch forward.
    _ = type_table[item_types]

    # --- get_inputs (glue: embedding gathers + concat) ---
    # TODO(synk): USE_dict/id_to_orgDict dict lookups replaced by a table gather.
    item_emb = use_table[item_inputs]                            # (B,S,D)
    pos_mask = (jnp.arange(S) > 0)[None, :, None]                # j==0 -> zeros
    item_emb = jnp.where(pos_mask, item_emb, 0.0)
    type_emb = type_table[type_inputs]                           # (B,S,D)
    qresp_rep = jnp.repeat(qresp_inputs[..., None].astype(jnp.float32), D, axis=-1)
    label_rep = jnp.repeat(label_inputs[..., None].astype(jnp.float32), D, axis=-1)
    inputs_cat = jnp.concatenate([item_emb, type_emb, qresp_rep, label_rep], -1)

    x = pallas_linear(inputs_cat, params['w_int'], params['b_int'], relu=True)

    # --- get_query ---
    query_embed = use_table[item_ids]                            # (B,S,D)

    l1, l2 = params['l1'], params['l2']
    qrel = bool(ablation['qrelation_include'])

    # head/layer-invariant blend of time_attn and rel_attn, computed once.
    base_attn, coef = pallas_base_attention(rel, timestamp, l1, l2, qrel)

    layers = params['attn_layers']
    L = len(layers)

    # All-layer Q projections fused into one matmul (query_embed is layer-invariant).
    w_q_all = jnp.concatenate([lyr['wq'] for lyr in layers], axis=1)   # (D, L*D)
    b_q_all = jnp.concatenate([lyr['bq'] for lyr in layers], axis=0)   # (L*D,)
    q_all = pallas_linear(query_embed, w_q_all, b_q_all)               # (B,S,L*D)

    outputs = None
    attn = None
    for li, layer in enumerate(layers):
        kv_in = x if li == 0 else outputs
        # fused K|V projection: reads kv_in once, lane-dense 2D output.
        w_kv = jnp.concatenate([layer['wk'], layer['wv']], axis=1)     # (D, 2D)
        b_kv = jnp.concatenate([layer['bk'], layer['bv']], axis=0)     # (2D,)
        kv = pallas_linear(kv_in, w_kv, b_kv)                          # (B,S,2D)
        q = q_all[..., li * D:(li + 1) * D]
        k = kv[..., :D]
        v = kv[..., D:]

        emit_attn = (li == L - 1)    # attn weights only needed for the last layer
        res = pallas_mha_attention(q, k, v, base_attn, coef, num_heads,
                                   emit_attn=emit_attn)
        if emit_attn:
            o, attn = res
        else:
            o = res
        if li == 0:
            outputs = o                              # dropout == identity (eval)
        else:
            outputs = outputs + jax.nn.relu(o)       # residual, dropout identity

    concat_q = jnp.concatenate([outputs, query_embed], axis=-1)        # (B,S,2D)
    output_ = pallas_final_head(concat_q, params['w_f1'], params['b_f1'],
                                params['w_f2'], params['b_f2'])        # (B,S,1)
    return output_, attn


# ------------------------- demo -------------------------

if __name__ == "__main__":
    B, S, D, H, L = 2, 8, 32, 4, 2
    NUM_ITEMS = 10
    ablation = {'qrelation_include': True}

    key = jax.random.PRNGKey(0)
    kp, k1, k2, k3, k4, k5, k6, k7, k8 = jax.random.split(key, 9)

    params = init_srl_kt_params(kp, D, H, L, NUM_ITEMS)

    item_inputs = jax.random.randint(k1, (B, S), 0, NUM_ITEMS)
    label_inputs = jax.random.randint(k2, (B, S), 0, 2).astype(jnp.float32)
    type_inputs = jax.random.randint(k3, (B, S), 0, 4)
    item_ids = jax.random.randint(k4, (B, S), 0, NUM_ITEMS)
    rel = jax.random.uniform(k5, (B, S, S), jnp.float32)
    timestamp = jax.random.uniform(k6, (B, S, S), jnp.float32, 0.0, 5.0)
    item_types = jax.random.randint(k7, (B, S), 0, 4)
    qresp_inputs = jax.random.randint(k8, (B, S), 0, 2).astype(jnp.float32)

    out, attn = srl_kt_forward(
        params, item_inputs, label_inputs, type_inputs, item_ids,
        rel, timestamp, item_types, qresp_inputs,
        num_heads=H, ablation=ablation)

    out = jax.block_until_ready(out)
    attn = jax.block_until_ready(attn)
    assert out.shape == (B, S, 1), out.shape
    assert attn.shape == (B, H, S, S), attn.shape
    assert bool(jnp.all(jnp.isfinite(out))) and bool(jnp.all(jnp.isfinite(attn)))
    print("KERNEL_OK")
</pallas_src>

<mosaic_0001>
module attributes {stable_mosaic.version = 11 : i64} {
  func.func @_linear_kernel(%arg0: i32, %arg1: memref<16x128xbf16, #tpu.memory_space<vmem>>, %arg2: memref<128x32xbf16, #tpu.memory_space<vmem>>, %arg3: memref<1x32xf32, #tpu.memory_space<vmem>>, %arg4: memref<16x32xf32, #tpu.memory_space<vmem>>) attributes {dimension_semantics = [#tpu.dimension_semantics<parallel>], iteration_bounds = array<i64: 1>, scalar_prefetch = 0 : i64, scratch_operands = 0 : i64, tpu.core_type = #tpu.core_type<tc>, window_params = [{transform_indices = @transform_0, window_bounds = array<i64: 16, 128>}, {pipeline_mode = #tpu.pipeline_mode<synchronous>, transform_indices = @transform_1, window_bounds = array<i64: 128, 32>}, {pipeline_mode = #tpu.pipeline_mode<synchronous>, transform_indices = @transform_2, window_bounds = array<i64: 1, 32>}, {transform_indices = @transform_3, window_bounds = array<i64: 16, 32>}]} {
    %c0 = arith.constant 0 : index
    %c0_0 = arith.constant 0 : index
    %0 = vector.load %arg1[%c0, %c0_0] : memref<16x128xbf16, #tpu.memory_space<vmem>>, vector<16x128xbf16>
    %c0_1 = arith.constant 0 : index
    %c0_2 = arith.constant 0 : index
    %1 = vector.load %arg2[%c0_1, %c0_2] : memref<128x32xbf16, #tpu.memory_space<vmem>>, vector<128x32xbf16>
    %cst = arith.constant dense<0.000000e+00> : vector<16x32xf32>
    %2 = tpu.matmul %0, %1, %cst {dimension_numbers = #tpu.dot_dimension_numbers<[1], [0], [0], [1], [0, 0, 1, 1], [], []>} : vector<16x128xbf16>, vector<128x32xbf16>, vector<16x32xf32> -> vector<16x32xf32>
    %c0_3 = arith.constant 0 : index
    %c0_4 = arith.constant 0 : index
    %3 = vector.load %arg3[%c0_3, %c0_4] : memref<1x32xf32, #tpu.memory_space<vmem>>, vector<1x32xf32>
    %4 = vector.broadcast %3 : vector<1x32xf32> to vector<16x32xf32>
    %5 = arith.addf %2, %4 : vector<16x32xf32>
    %cst_5 = arith.constant 0.000000e+00 : f32
    %6 = vector.broadcast %cst_5 : f32 to vector<16x32xf32>
    %7 = arith.maximumf %5, %6 : vector<16x32xf32>
    %c0_6 = arith.constant 0 : index
    %c0_7 = arith.constant 0 : index
    %8 = vector.load %arg4[%c0_6, %c0_7] : memref<16x32xf32, #tpu.memory_space<vmem>>, vector<16x32xf32>
    tpu.vector_store %arg4[%c0_6, %c0_7], %7 {strides = array<i32>} : memref<16x32xf32, #tpu.memory_space<vmem>>, vector<16x32xf32>,
    return
  }
  func.func @transform_0(%arg0: i32) -> (i32, i32) {
    %c0_i32 = arith.constant 0 : i32
    %c0_i32_0 = arith.constant 0 : i32
    return %arg0, %c0_i32 : i32, i32
  }
  func.func @transform_1(%arg0: i32) -> (i32, i32) {
    %c0_i32 = arith.constant 0 : i32
    %c0_i32_0 = arith.constant 0 : i32
    %c0_i32_1 = arith.constant 0 : i32
    return %c0_i32, %c0_i32_0 : i32, i32
  }
  func.func @transform_2(%arg0: i32) -> (i32, i32) {
    %c0_i32 = arith.constant 0 : i32
    %c0_i32_0 = arith.constant 0 : i32
    %c0_i32_1 = arith.constant 0 : i32
    return %c0_i32, %c0_i32_0 : i32, i32
  }
  func.func @transform_3(%arg0: i32) -> (i32, i32) {
    %c0_i32 = arith.constant 0 : i32
    %c0_i32_0 = arith.constant 0 : i32
    return %arg0, %c0_i32 : i32, i32
  }
}

</mosaic_0001>

<llo_original>
// kernel: tpu_custom_call.1
$region0: #{tpu_custom_call.1}
  #allocation0 [shape = 'u32[]', space=smem, size = 0x4, offset = 0x4, fixed_abs, tag = 'smem constant byte address 0x4 - core index']
  #allocation1 [shape = 'u32[144,128]{1,0:T(1,128)}', space=vmem, size = 0x12000, scoped, tag = 'internal scratch']
  %s0 = inlined_call_operand.vmem [shape: bf16[16,128], index: 0, kind: input, shape index: {}]
  %s1 = inlined_call_operand.vmem [shape: bf16[128,32], index: 1, kind: input, shape index: {}]
  %s2 = inlined_call_operand.vmem [shape: f32[1,32], index: 2, kind: input, shape index: {}]
  %s3 = inlined_call_operand.hbm [shape: f32[16,32], index: 3, kind: output, shape index: {}]
  %s4 = sld [smem:[#allocation0]]
  $region22: #{tpu_custom_call.1} parent=0
    _
  %s6 = ssub.s32 1, %s4
  %s7 = scalar_select 0, %s6, %s4
  $region1: #{tpu_custom_call.1} parent=0
    #allocation2 [shape = 'u8[8192]{0}', space=vmem, size = 0x2000, scoped, tag = 'output window, operand 0, single buffered']
    #allocation3 [shape = 's32[1]{0}', space=sflag, size = 0x4, scoped, tag = 'scoped memory for tpu_custom_call.1']
    %8 = vsyncpa [#allocation3], 0
    // Predicated region
    $region2: #{tpu_custom_call.1} parent=1 // pred_check
      _
    $region3: #{tpu_custom_call.1} parent=1 // pred_check_branch
      %10 = sbr.rel (0) target = $region5
    $region4: #{tpu_custom_call.1} parent=1 // pred_region
      _
    $region5: #{tpu_custom_call.1} parent=1 // pred_fallthru
      _
    // Predicated region
    $region6: #{tpu_custom_call.1} parent=1 // pred_check
      _
    $region7: #{tpu_custom_call.1} parent=1 // pred_check_branch
      %12 = sbr.rel (0) target = $region9
    $region8: #{tpu_custom_call.1} parent=1 // pred_region
      _
    $region9: #{tpu_custom_call.1} parent=1 // pred_fallthru
      _
    // Predicated region
    $region10: #{tpu_custom_call.1} parent=1 // pred_check
      _
    $region11: #{tpu_custom_call.1} parent=1 // pred_check_branch
      %14 = sbr.rel (0) target = $region13
    $region12: #{tpu_custom_call.1} parent=1 // pred_region
      _
    $region13: #{tpu_custom_call.1} parent=1 // pred_fallthru
      _
    %v16 = vld [vmem:[%s0] sm:$0xf]
    %v17 = vld [vmem:[%s0 + $0x4] sm:$0xf]
    %v18 = vld [vmem:[%s1] sm:$0xf]
    %v19 = vld [vmem:[%s1 + $0x4] sm:$0xf]
    %v20 = vld [vmem:[%s1 + $0x8] sm:$0xf]
    %v21 = vld [vmem:[%s1 + $0xc] sm:$0xf]
    %v22 = vld [vmem:[%s1 + $0x10] sm:$0xf]
    %v23 = vld [vmem:[%s1 + $0x14] sm:$0xf]
    %v24 = vld [vmem:[%s1 + $0x18] sm:$0xf]
    %v25 = vld [vmem:[%s1 + $0x1c] sm:$0xf]
    %v26 = vld [vmem:[%s1 + $0x20] sm:$0xf]
    %v27 = vld [vmem:[%s1 + $0x24] sm:$0xf]
    %v28 = vld [vmem:[%s1 + $0x28] sm:$0xf]
    %v29 = vld [vmem:[%s1 + $0x2c] sm:$0xf]
    %v30 = vld [vmem:[%s1 + $0x30] sm:$0xf]
    %v31 = vld [vmem:[%s1 + $0x34] sm:$0xf]
    %v32 = vld [vmem:[%s1 + $0x38] sm:$0xf]
    %v33 = vld [vmem:[%s1 + $0x3c] sm:$0xf]
    %v34 = vld [vmem:[%s2] sm:$0x1]
    %v36 = vlaneseq
    %v37 = vshrl.u32 %v36, 7
    %v38 = vsub.s32 0, %v37
    %v39 = vrot.slane %v34, %v38
    %v43 = vunpack.c.l.b16 %v16
    %v44 = vunpack.c.l.b16 %v17
    %v45 = vpack.c.b16 %v44, %v43
    %v63 = vunpack.c.l.b16 %v18
    %v64 = vunpack.c.l.b16 %v19
    %v65 = vunpack.c.l.b16 %v20
    %v66 = vunpack.c.l.b16 %v21
    %v67 = vunpack.c.l.b16 %v22
    %v68 = vunpack.c.l.b16 %v23
    %v69 = vunpack.c.l.b16 %v24
    %v70 = vunpack.c.l.b16 %v25
    %v71 = vunpack.c.l.b16 %v26
    %v72 = vunpack.c.l.b16 %v27
    %v73 = vunpack.c.l.b16 %v28
    %v74 = vunpack.c.l.b16 %v29
    %v75 = vunpack.c.l.b16 %v30
    %v76 = vunpack.c.l.b16 %v31
    %v77 = vunpack.c.l.b16 %v32
    %v78 = vunpack.c.l.b16 %v33
    %v79 = vpack.c.b16 %v64, %v63
    %v80 = vpack.c.b16 %v66, %v65
    %v81 = vpack.c.b16 %v68, %v67
    %v82 = vpack.c.b16 %v70, %v69
    %v83 = vpack.c.b16 %v72, %v71
    %v84 = vpack.c.b16 %v74, %v73
    %v85 = vpack.c.b16 %v76, %v75
    %v86 = vpack.c.b16 %v78, %v77
    %95 = vmatprep.subr.bf16.mxu0 0
    %96 = vmatpush1.bf16.msra.mxu0 %v79
    %97 = vmatprep.subr.bf16.mxu0 0
    %98 = vmatpush1.bf16.msra.mxu0 %v80
    %99 = vmatprep.subr.bf16.mxu0 0
    %100 = vmatpush1.bf16.msra.mxu0 %v81
    %101 = vmatprep.subr.bf16.mxu0 0
    %102 = vmatpush1.bf16.msra.mxu0 %v82
    %103 = vmatprep.subr.bf16.mxu0 0
    %104 = vmatpush1.bf16.msra.mxu0 %v83
    %105 = vmatprep.subr.bf16.mxu0 0
    %106 = vmatpush1.bf16.msra.mxu0 %v84
    %107 = vmatprep.subr.bf16.mxu0 0
    %108 = vmatpush1.bf16.msra.mxu0 %v85
    %109 = vmatprep.subr.bf16.mxu0 0
    %110 = vmatpush1.bf16.msra.mxu0 %v86
    %111 = vmatprep.subr.bf16.mxu0 0
    %112 = vmatpush1.bf16.msra.mxu0 0
    %113 = vmatprep.subr.bf16.mxu0 0
    %114 = vmatpush1.bf16.msra.mxu0 0
    %115 = vmatprep.subr.bf16.mxu0 0
    %116 = vmatpush1.bf16.msra.mxu0 0
    %117 = vmatprep.subr.bf16.mxu0 0
    %118 = vmatpush1.bf16.msra.mxu0 0
    %119 = vmatprep.subr.bf16.mxu0 0
    %120 = vmatpush1.bf16.msra.mxu0 0
    %121 = vmatprep.subr.bf16.mxu0 0
    %122 = vmatpush1.bf16.msra.mxu0 0
    %123 = vmatprep.subr.bf16.mxu0 0
    %124 = vmatpush1.bf16.msra.mxu0 0
    %125 = vmatprep.subr.bf16.mxu0 0
    %126 = vmatpush1.bf16.msra.mxu0 0
    %127 = vmatprep.mubr.bf16.mxu0 0
    %128 = vmatmul.mubr.bf16.gmra.mrb[0].mxu0 %v45
    %v129 = vpop.f32.mrb[0].mxu0
    %v130 = vadd.f32 %v39, %v129
    %v131 = vpop.f32.mrb[0].mxu0
    %v132 = vpop.f32.mrb[0].mxu0
    %v133 = vadd.f32 %v39, %v132
    %v134 = vpop.f32.mrb[0].mxu0
    %135 = vdwg.mxu0
    %v136 = vmax.f32 %v130, 0.0
    %v137 = vmax.f32 %v133, 0.0
    %vm138 = vcmask 261120
    %139 = vst.msk [vmem:[#allocation2] sm:$0xff] %vm138, %v136
    %140 = vst.msk [vmem:[#allocation2 + $0x8] sm:$0xff] %vm138, %v137
    // Predicated region
    $region14: #{tpu_custom_call.1} parent=1 // pred_check
      _
    $region15: #{tpu_custom_call.1} parent=1 // pred_check_branch
      %142 = sbr.rel (0) target = $region17
    $region16: #{tpu_custom_call.1} parent=1 // pred_region
      %s144 = ssub.s32 256, 256
      %145 = vsyncadd [#allocation3], %s144
      %s146 = sshll.u32 [#allocation2], 4
      %s147 = int_to_ptr.vmem [resolvable:$true] %s146
      %152 = dma.vmem_to_hbm [thread:$0]  %s147, 256, %s3, [#allocation3], 128, 128, 8
    $region17: #{tpu_custom_call.1} parent=1 // pred_fallthru
      _
    // Predicated region
    $region18: #{tpu_custom_call.1} parent=1 // pred_check
      _
    $region19: #{tpu_custom_call.1} parent=1 // pred_check_branch
      %154 = sbr.rel (0) target = $region21
    $region20: #{tpu_custom_call.1} parent=1 // pred_region
      %155 = dma.done [#allocation3], 256
    $region21: #{tpu_custom_call.1} parent=1 // pred_fallthru
      _
    %156 = vsyncpa [#allocation3], 1

</llo_original>
